<compile_context>
chip_gen: v6e
topology: v6e:2x2x1
jax: 0.10.0
libtpu: 0.0.40
codegen_flags: <defaults>
</compile_context>

<pallas_src>
import jax
import jax.numpy as jnp
from jax.experimental import pallas as pl
from jax.experimental.pallas import tpu as pltpu


def _round_up(x, m):
    return ((x + m - 1) // m) * m


def _choose_tile_rows(tile_rows, B8, D_pad, C_pad, with_l,
                      vmem_budget=24 * 1024 * 1024):
    """Pick the largest batch-tile that keeps double-buffered tiles + resident
    W under a conservative scoped-VMEM budget (safe on v5e/v6e/v7x defaults)."""
    tm = _round_up(min(tile_rows, B8), 8)
    w_bytes = 2 * D_pad * C_pad * 4          # resident weight (2 buffers)
    bias_bytes = 2 * C_pad * 4
    while tm > 8:
        in_row = D_pad * 4 + (C_pad * 4 if with_l else 0)   # x (+ l) per row
        out_row = 4 if with_l else C_pad * 4                 # output per row
        need = w_bytes + bias_bytes + 2 * tm * (in_row + out_row)
        if need <= vmem_budget:
            break
        tm //= 2
    return max(tm, 8)


def _kernel_with_l(x_ref, w_ref, b_ref, l_ref, out_ref):
    # logits = x @ W + b   (MXU matmul, f32 accumulation)
    logits = jnp.dot(x_ref[...], w_ref[...], preferred_element_type=jnp.float32)
    probs = jax.nn.sigmoid(logits + b_ref[...])          # (TM, C_pad)
    masked = probs * l_ref[...]                          # (TM, C_pad)
    # Row-sum over classes produced with batch on the LANE axis:
    #   (1, C_pad) . (TM, C_pad)^T -> (1, TM)   (standard A·B^T contraction)
    # so the reduced result is stored lane-dense (no (B,1) masked stores).
    ones = jnp.ones((1, masked.shape[1]), jnp.float32)
    out_ref[...] = jax.lax.dot_general(
        ones, masked, (((1,), (1,)), ((), ())),
        preferred_element_type=jnp.float32)


def _kernel_no_l(x_ref, w_ref, b_ref, out_ref):
    logits = jnp.dot(x_ref[...], w_ref[...], preferred_element_type=jnp.float32)
    # Single full-width, lane-dense store of the (TM, C_pad) tile.
    out_ref[...] = jax.nn.sigmoid(logits + b_ref[...])


def logits_to_predicate(x, w, b, l=None, *, tile_rows=256):
    """JAX/Pallas equivalent of LogitsToPredicate.forward(x, l).

    x: (B, D) f32, w: (D, C) f32 (transposed nn.Linear weight), b: (C,) f32,
    l: (B, C) f32 or None.
    Returns a 1-D array: shape (B,) if l is given, else (B*C,).
    """
    B, D = x.shape
    C = w.shape[1]

    # ---- pad to MXU / vreg friendly shapes (zeros are exact no-ops) ----
    D_pad = _round_up(D, 128)
    C_pad = _round_up(C, 128)
    B8 = _round_up(B, 8)
    TM = _choose_tile_rows(tile_rows, B8, D_pad, C_pad, with_l=(l is not None))
    B_pad = _round_up(B8, TM)
    grid = (B_pad // TM,)

    x_p = jnp.pad(x, ((0, B_pad - B), (0, D_pad - D)))
    w_p = jnp.pad(w, ((0, D_pad - D), (0, C_pad - C)))
    b_p = jnp.pad(b, (0, C_pad - C)).reshape(1, C_pad)

    params = pltpu.CompilerParams(dimension_semantics=("parallel",))

    if l is not None:
        l_p = jnp.pad(l, ((0, B_pad - B), (0, C_pad - C)))
        out = pl.pallas_call(
            _kernel_with_l,
            out_shape=jax.ShapeDtypeStruct((1, B_pad), jnp.float32),
            grid=grid,
            in_specs=[
                pl.BlockSpec((TM, D_pad), lambda i: (i, 0)),      # x tile
                pl.BlockSpec((D_pad, C_pad), lambda i: (0, 0)),   # W resident
                pl.BlockSpec((1, C_pad), lambda i: (0, 0)),       # bias resident
                pl.BlockSpec((TM, C_pad), lambda i: (i, 0)),      # l tile
            ],
            out_specs=pl.BlockSpec((1, TM), lambda i: (0, i)),    # lane-dense
            compiler_params=params,
        )(x_p, w_p, b_p, l_p)
        return out.reshape(-1)[:B]                                # .view(-1)
    else:
        out = pl.pallas_call(
            _kernel_no_l,
            out_shape=jax.ShapeDtypeStruct((B_pad, C_pad), jnp.float32),
            grid=grid,
            in_specs=[
                pl.BlockSpec((TM, D_pad), lambda i: (i, 0)),
                pl.BlockSpec((D_pad, C_pad), lambda i: (0, 0)),
                pl.BlockSpec((1, C_pad), lambda i: (0, 0)),
            ],
            out_specs=pl.BlockSpec((TM, C_pad), lambda i: (i, 0)),
            compiler_params=params,
        )(x_p, w_p, b_p)
        return out[:B, :C].reshape(-1)                            # .view(-1)


def _reference(x, w, b, l=None):
    logits = x @ w + b
    probs = jax.nn.sigmoid(logits)
    if l is not None:
        return jnp.sum(probs * l, axis=1).reshape(-1)
    return probs.reshape(-1)


if __name__ == "__main__":
    key = jax.random.PRNGKey(0)
    B, D, C = 8, 32, 16          # batch, in_features, n_classes

    kx, kw, kb, kl = jax.random.split(key, 4)
    x = jax.random.normal(kx, (B, D), dtype=jnp.float32)
    # deterministic "Linear" parameters (synthetic, not a checkpoint)
    w = jax.random.normal(kw, (D, C), dtype=jnp.float32) * (1.0 / jnp.sqrt(D))
    b = jax.random.normal(kb, (C,), dtype=jnp.float32) * 0.01
    # one-hot class labels
    labels = jax.random.randint(kl, (B,), 0, C)
    l = jax.nn.one_hot(labels, C, dtype=jnp.float32)

    # path with class selector l
    out_l = jax.block_until_ready(logits_to_predicate(x, w, b, l))
    ref_l = _reference(x, w, b, l)
    assert out_l.shape == (B,)
    assert jnp.allclose(out_l, ref_l, atol=1e-5, rtol=1e-5)

    # path with l = None (returns sigmoid probs flattened)
    out_n = jax.block_until_ready(logits_to_predicate(x, w, b, None))
    ref_n = _reference(x, w, b, None)
    assert out_n.shape == (B * C,)
    assert jnp.allclose(out_n, ref_n, atol=1e-5, rtol=1e-5)

    print("KERNEL_OK")
</pallas_src>

<mosaic_0001>
module attributes {stable_mosaic.version = 11 : i64} {
  func.func @_kernel_with_l(%arg0: i32, %arg1: memref<8x128xf32, #tpu.memory_space<vmem>>, %arg2: memref<128x128xf32, #tpu.memory_space<vmem>>, %arg3: memref<1x128xf32, #tpu.memory_space<vmem>>, %arg4: memref<8x128xf32, #tpu.memory_space<vmem>>, %arg5: memref<1x8xf32, #tpu.memory_space<vmem>>) attributes {dimension_semantics = [#tpu.dimension_semantics<parallel>], iteration_bounds = array<i64: 1>, scalar_prefetch = 0 : i64, scratch_operands = 0 : i64, tpu.core_type = #tpu.core_type<tc>, window_params = [{transform_indices = @transform_0, window_bounds = array<i64: 8, 128>}, {pipeline_mode = #tpu.pipeline_mode<synchronous>, transform_indices = @transform_1, window_bounds = array<i64: 128, 128>}, {pipeline_mode = #tpu.pipeline_mode<synchronous>, transform_indices = @transform_2, window_bounds = array<i64: 1, 128>}, {transform_indices = @transform_3, window_bounds = array<i64: 8, 128>}, {transform_indices = @transform_4, window_bounds = array<i64: 1, 8>}]} {
    %c0 = arith.constant 0 : index
    %c0_0 = arith.constant 0 : index
    %0 = vector.load %arg1[%c0, %c0_0] : memref<8x128xf32, #tpu.memory_space<vmem>>, vector<8x128xf32>
    %c0_1 = arith.constant 0 : index
    %c0_2 = arith.constant 0 : index
    %1 = vector.load %arg2[%c0_1, %c0_2] : memref<128x128xf32, #tpu.memory_space<vmem>>, vector<128x128xf32>
    %cst = arith.constant dense<0.000000e+00> : vector<8x128xf32>
    %2 = tpu.matmul %0, %1, %cst {dimension_numbers = #tpu.dot_dimension_numbers<[1], [0], [0], [1], [0, 0, 1, 1], [], []>} : vector<8x128xf32>, vector<128x128xf32>, vector<8x128xf32> -> vector<8x128xf32>
    %c0_3 = arith.constant 0 : index
    %c0_4 = arith.constant 0 : index
    %3 = vector.load %arg3[%c0_3, %c0_4] : memref<1x128xf32, #tpu.memory_space<vmem>>, vector<1x128xf32>
    %4 = vector.broadcast %3 : vector<1x128xf32> to vector<8x128xf32>
    %5 = arith.addf %2, %4 : vector<8x128xf32>
    %6 = arith.negf %5 : vector<8x128xf32>
    %7 = math.exp %6 : vector<8x128xf32>
    %cst_5 = arith.constant 1.000000e+00 : f32
    %8 = vector.broadcast %cst_5 : f32 to vector<8x128xf32>
    %9 = arith.addf %8, %7 : vector<8x128xf32>
    %10 = arith.divf %8, %9 : vector<8x128xf32>
    %c0_6 = arith.constant 0 : index
    %c0_7 = arith.constant 0 : index
    %11 = vector.load %arg4[%c0_6, %c0_7] : memref<8x128xf32, #tpu.memory_space<vmem>>, vector<8x128xf32>
    %12 = arith.mulf %10, %11 : vector<8x128xf32>
    %cst_8 = arith.constant 1.000000e+00 : f32
    %13 = vector.broadcast %cst_8 : f32 to vector<1x128xf32>
    %cst_9 = arith.constant dense<0.000000e+00> : vector<1x8xf32>
    %14 = tpu.matmul %13, %12, %cst_9 {dimension_numbers = #tpu.dot_dimension_numbers<[1], [1], [0], [0], [0, 0, 1, 0], [], []>} : vector<1x128xf32>, vector<8x128xf32>, vector<1x8xf32> -> vector<1x8xf32>
    %c0_10 = arith.constant 0 : index
    %c0_11 = arith.constant 0 : index
    %15 = vector.load %arg5[%c0_10, %c0_11] : memref<1x8xf32, #tpu.memory_space<vmem>>, vector<1x8xf32>
    tpu.vector_store %arg5[%c0_10, %c0_11], %14 {strides = array<i32>} : memref<1x8xf32, #tpu.memory_space<vmem>>, vector<1x8xf32>,
    return
  }
  func.func @transform_0(%arg0: i32) -> (i32, i32) {
    %c0_i32 = arith.constant 0 : i32
    %c0_i32_0 = arith.constant 0 : i32
    return %arg0, %c0_i32 : i32, i32
  }
  func.func @transform_1(%arg0: i32) -> (i32, i32) {
    %c0_i32 = arith.constant 0 : i32
    %c0_i32_0 = arith.constant 0 : i32
    %c0_i32_1 = arith.constant 0 : i32
    return %c0_i32, %c0_i32_0 : i32, i32
  }
  func.func @transform_2(%arg0: i32) -> (i32, i32) {
    %c0_i32 = arith.constant 0 : i32
    %c0_i32_0 = arith.constant 0 : i32
    %c0_i32_1 = arith.constant 0 : i32
    return %c0_i32, %c0_i32_0 : i32, i32
  }
  func.func @transform_3(%arg0: i32) -> (i32, i32) {
    %c0_i32 = arith.constant 0 : i32
    %c0_i32_0 = arith.constant 0 : i32
    return %arg0, %c0_i32 : i32, i32
  }
  func.func @transform_4(%arg0: i32) -> (i32, i32) {
    %c0_i32 = arith.constant 0 : i32
    %c0_i32_0 = arith.constant 0 : i32
    return %c0_i32, %arg0 : i32, i32
  }
}

</mosaic_0001>

<llo_original>
// kernel: tpu_custom_call.1
$region0: #{tpu_custom_call.1}
  #allocation0 [shape = 'u32[]', space=smem, size = 0x4, offset = 0x4, fixed_abs, tag = 'smem constant byte address 0x4 - core index']
  #allocation1 [shape = 'u32[144,128]{1,0:T(1,128)}', space=vmem, size = 0x12000, scoped, tag = 'internal scratch']
  %s0 = inlined_call_operand.hbm [shape: f32[8,128], index: 0, kind: input, shape index: {}]
  %s1 = inlined_call_operand.hbm [shape: f32[128,128], index: 1, kind: input, shape index: {}]
  %s2 = inlined_call_operand.vmem [shape: f32[1,128], index: 2, kind: input, shape index: {}]
  %s3 = inlined_call_operand.hbm [shape: f32[8,128], index: 3, kind: input, shape index: {}]
  %s4 = inlined_call_operand.hbm [shape: f32[1,8], index: 4, kind: output, shape index: {}]
  %s5 = sld [smem:[#allocation0]]
  $region38: #{tpu_custom_call.1} parent=0
    _
  %s7 = ssub.s32 1, %s5
  %s8 = scalar_select 0, %s7, %s5
  $region1: #{tpu_custom_call.1} parent=0
    #allocation2 [shape = 'u8[4096]{0}', space=vmem, size = 0x1000, scoped, tag = 'input window, operand 0, single buffered']
    #allocation3 [shape = 's32[1]{0}', space=sflag, size = 0x4, scoped, tag = 'scoped memory for tpu_custom_call.1']
    #allocation4 [shape = 's32[1]{0}', space=sflag, size = 0x4, scoped, tag = 'scoped memory for tpu_custom_call.1']
    #allocation5 [shape = 'u8[65536]{0}', space=vmem, size = 0x10000, scoped, tag = 'input window, operand 1, single buffered']
    #allocation6 [shape = 's32[1]{0}', space=sflag, size = 0x4, scoped, tag = 'scoped memory for tpu_custom_call.1']
    #allocation7 [shape = 'u8[4096]{0}', space=vmem, size = 0x1000, scoped, tag = 'input window, operand 3, single buffered']
    #allocation8 [shape = 'u8[512]{0}', space=vmem, size = 0x400, scoped, tag = 'output window, operand 0, single buffered']
    %9 = vsyncpa [#allocation3], 0
    %10 = vsyncpa [#allocation6], 0
    %11 = vsyncpa [#allocation4], 0
    // Predicated region
    $region2: #{tpu_custom_call.1} parent=1 // pred_check
      _
    $region3: #{tpu_custom_call.1} parent=1 // pred_check_branch
      %13 = sbr.rel (0) target = $region5
    $region4: #{tpu_custom_call.1} parent=1 // pred_region
      %s15 = ssub.s32 128, 128
      %16 = vsyncadd [#allocation3], %s15
      %s18 = sshll.u32 [#allocation2], 4
      %s19 = int_to_ptr.vmem [resolvable:$true] %s18
      %21 = dma.hbm_to_vmem [thread:$0]  %s0, 128, %s19, [#allocation3]
    $region5: #{tpu_custom_call.1} parent=1 // pred_fallthru
      _
    // Predicated region
    $region6: #{tpu_custom_call.1} parent=1 // pred_check
      _
    $region7: #{tpu_custom_call.1} parent=1 // pred_check_branch
      %23 = sbr.rel (0) target = $region9
    $region8: #{tpu_custom_call.1} parent=1 // pred_region
      %s25 = ssub.s32 2048, 2048
      %26 = vsyncadd [#allocation6], %s25
      %s27 = sshll.u32 [#allocation5], 4
      %s28 = int_to_ptr.vmem [resolvable:$true] %s27
      %33 = dma.hbm_to_vmem [thread:$0]  %s1, 2048, %s28, [#allocation6], 128, 128, 8
    $region9: #{tpu_custom_call.1} parent=1 // pred_fallthru
      _
    // Predicated region
    $region10: #{tpu_custom_call.1} parent=1 // pred_check
      _
    $region11: #{tpu_custom_call.1} parent=1 // pred_check_branch
      %35 = sbr.rel (0) target = $region13
    $region12: #{tpu_custom_call.1} parent=1 // pred_region
      _
    $region13: #{tpu_custom_call.1} parent=1 // pred_fallthru
      _
    // Predicated region
    $region14: #{tpu_custom_call.1} parent=1 // pred_check
      _
    $region15: #{tpu_custom_call.1} parent=1 // pred_check_branch
      %37 = sbr.rel (0) target = $region17
    $region16: #{tpu_custom_call.1} parent=1 // pred_region
      %s39 = ssub.s32 128, 128
      %40 = vsyncadd [#allocation6], %s39
      %s42 = sshll.u32 [#allocation7], 4
      %s43 = int_to_ptr.vmem [resolvable:$true] %s42
      %45 = dma.hbm_to_vmem [thread:$0]  %s3, 128, %s43, [#allocation6]
    $region17: #{tpu_custom_call.1} parent=1 // pred_fallthru
      _
    // Predicated region
    $region18: #{tpu_custom_call.1} parent=1 // pred_check
      _
    $region19: #{tpu_custom_call.1} parent=1 // pred_check_branch
      %47 = sbr.rel (0) target = $region21
    $region20: #{tpu_custom_call.1} parent=1 // pred_region
      %48 = dma.done [#allocation3], 128
    $region21: #{tpu_custom_call.1} parent=1 // pred_fallthru
      _
    // Predicated region
    $region22: #{tpu_custom_call.1} parent=1 // pred_check
      _
    $region23: #{tpu_custom_call.1} parent=1 // pred_check_branch
      %50 = sbr.rel (0) target = $region25
    $region24: #{tpu_custom_call.1} parent=1 // pred_region
      %51 = dma.done [#allocation6], 2048
    $region25: #{tpu_custom_call.1} parent=1 // pred_fallthru
      _
    // Predicated region
    $region26: #{tpu_custom_call.1} parent=1 // pred_check
      _
    $region27: #{tpu_custom_call.1} parent=1 // pred_check_branch
      %53 = sbr.rel (0) target = $region29
    $region28: #{tpu_custom_call.1} parent=1 // pred_region
      %54 = dma.done [#allocation6], 128
    $region29: #{tpu_custom_call.1} parent=1 // pred_fallthru
      _
    %v55 = vld [vmem:[#allocation2] sm:$0xff]
    %v56 = vld [vmem:[#allocation5] sm:$0xff]
    %v57 = vld [vmem:[#allocation5 + $0x8] sm:$0xff]
    %v58 = vld [vmem:[#allocation5 + $0x10] sm:$0xff]
    %v59 = vld [vmem:[#allocation5 + $0x18] sm:$0xff]
    %v60 = vld [vmem:[#allocation5 + $0x20] sm:$0xff]
    %v61 = vld [vmem:[#allocation5 + $0x28] sm:$0xff]
    %v62 = vld [vmem:[#allocation5 + $0x30] sm:$0xff]
    %v63 = vld [vmem:[#allocation5 + $0x38] sm:$0xff]
    %v64 = vld [vmem:[#allocation5 + $0x40] sm:$0xff]
    %v65 = vld [vmem:[#allocation5 + $0x48] sm:$0xff]
    %v66 = vld [vmem:[#allocation5 + $0x50] sm:$0xff]
    %v67 = vld [vmem:[#allocation5 + $0x58] sm:$0xff]
    %v68 = vld [vmem:[#allocation5 + $0x60] sm:$0xff]
    %v69 = vld [vmem:[#allocation5 + $0x68] sm:$0xff]
    %v70 = vld [vmem:[#allocation5 + $0x70] sm:$0xff]
    %v71 = vld [vmem:[#allocation5 + $0x78] sm:$0xff]
    %v72 = vld [vmem:[%s2] sm:$0x1]
    %v74 = vlaneseq
    %v75 = vshrl.u32 %v74, 7
    %v76 = vsub.s32 0, %v75
    %v77 = vrot.slane %v72, %v76
    %79 = vmatprep.subr.mxu0 0.0
    %80 = vmatpush1.msra.mxu0 %v71
    %81 = vmatprep.subr.mxu0 0.0
    %82 = vmatpush1.msra.mxu0 %v70
    %83 = vmatprep.subr.mxu0 0.0
    %84 = vmatpush1.msra.mxu0 %v69
    %85 = vmatprep.subr.mxu0 0.0
    %86 = vmatpush1.msra.mxu0 %v68
    %87 = vmatprep.subr.mxu0 0.0
    %88 = vmatpush1.msra.mxu0 %v67
    %89 = vmatprep.subr.mxu0 0.0
    %90 = vmatpush1.msra.mxu0 %v66
    %91 = vmatprep.subr.mxu0 0.0
    %92 = vmatpush1.msra.mxu0 %v65
    %93 = vmatprep.subr.mxu0 0.0
    %94 = vmatpush1.msra.mxu0 %v64
    %95 = vmatprep.subr.mxu0 0.0
    %96 = vmatpush1.msra.mxu0 %v63
    %97 = vmatprep.subr.mxu0 0.0
    %98 = vmatpush1.msra.mxu0 %v62
    %99 = vmatprep.subr.mxu0 0.0
    %100 = vmatpush1.msra.mxu0 %v61
    %101 = vmatprep.subr.mxu0 0.0
    %102 = vmatpush1.msra.mxu0 %v60
    %103 = vmatprep.subr.mxu0 0.0
    %104 = vmatpush1.msra.mxu0 %v59
    %105 = vmatprep.subr.mxu0 0.0
    %106 = vmatpush1.msra.mxu0 %v58
    %107 = vmatprep.subr.mxu0 0.0
    %108 = vmatpush1.msra.mxu0 %v57
    %109 = vmatprep.subr.mxu0 0.0
    %110 = vmatpush1.msra.mxu0 %v56
    %111 = vmatprep.subr.mxu0 0.0
    %112 = vmatpush2.msra.mxu0 0.0
    %113 = vmatprep.subr.mxu0 0.0
    %114 = vmatpush2.msra.mxu0 0.0
    %115 = vmatprep.subr.mxu0 0.0
    %116 = vmatpush2.msra.mxu0 0.0
    %117 = vmatprep.subr.mxu0 0.0
    %118 = vmatpush2.msra.mxu0 0.0
    %119 = vmatprep.subr.mxu0 0.0
    %120 = vmatpush2.msra.mxu0 0.0
    %121 = vmatprep.subr.mxu0 0.0
    %122 = vmatpush2.msra.mxu0 0.0
    %123 = vmatprep.subr.mxu0 0.0
    %124 = vmatpush2.msra.mxu0 0.0
    %125 = vmatprep.subr.mxu0 0.0
    %126 = vmatpush2.msra.mxu0 0.0
    %127 = vmatprep.subr.mxu0 0.0
    %128 = vmatpush2.msra.mxu0 0.0
    %129 = vmatprep.subr.mxu0 0.0
    %130 = vmatpush2.msra.mxu0 0.0
    %131 = vmatprep.subr.mxu0 0.0
    %132 = vmatpush2.msra.mxu0 0.0
    %133 = vmatprep.subr.mxu0 0.0
    %134 = vmatpush2.msra.mxu0 0.0
    %135 = vmatprep.subr.mxu0 0.0
    %136 = vmatpush2.msra.mxu0 0.0
    %137 = vmatprep.subr.mxu0 0.0
    %138 = vmatpush2.msra.mxu0 0.0
    %139 = vmatprep.subr.mxu0 0.0
    %140 = vmatpush2.msra.mxu0 0.0
    %141 = vmatprep.subr.mxu0 0.0
    %142 = vmatpush2.msra.mxu0 0.0
    %143 = vmatprep.mubr.f32.mxu0 0.0
    %144 = vmatmul.mubr.f32.gmra.mxu0 %v55
    %v145 = vpop.f32.mrf.mxu0
    %v146 = vadd.f32 %v77, %v145
    %v147 = vpop.f32.mrf.mxu0
    %148 = vdwg.mxu0
    %v149 = vxor.u32 %v146, 2147483648
    %v150 = vmul.f32 %v149, 1.442695
    %v151 = vpow.pop %v150
    %v152 = vadd.f32 %v151, 1.0
    %v153 = vrcp.pop %v152
    %v154 = vmul.f32 1.0, %v153
    %v155 = vld [vmem:[#allocation7] sm:$0xff]
    %v156 = vmul.f32 %v154, %v155
    %157 = vmatprep.subr.mxu0 0.0
    %158 = vmatpush1.xpose.msra.mxu0 0.0
    %159 = vmatprep.subr.mxu0 0.0
    %160 = vmatpush1.xpose.msra.mxu0 0.0
    %161 = vmatprep.subr.mxu0 0.0
    %162 = vmatpush1.xpose.msra.mxu0 0.0
    %163 = vmatprep.subr.mxu0 0.0
    %164 = vmatpush1.xpose.msra.mxu0 0.0
    %165 = vmatprep.subr.mxu0 0.0
    %166 = vmatpush1.xpose.msra.mxu0 0.0
    %167 = vmatprep.subr.mxu0 0.0
    %168 = vmatpush1.xpose.msra.mxu0 0.0
    %169 = vmatprep.subr.mxu0 0.0
    %170 = vmatpush1.xpose.msra.mxu0 0.0
    %171 = vmatprep.subr.mxu0 0.0
    %172 = vmatpush1.xpose.msra.mxu0 0.0
    %173 = vmatprep.subr.mxu0 0.0
    %174 = vmatpush1.xpose.msra.mxu0 0.0
    %175 = vmatprep.subr.mxu0 0.0
    %176 = vmatpush1.xpose.msra.mxu0 0.0
    %177 = vmatprep.subr.mxu0 0.0
    %178 = vmatpush1.xpose.msra.mxu0 0.0
    %179 = vmatprep.subr.mxu0 0.0
    %180 = vmatpush1.xpose.msra.mxu0 0.0
    %181 = vmatprep.subr.mxu0 0.0
    %182 = vmatpush1.xpose.msra.mxu0 0.0
    %183 = vmatprep.subr.mxu0 0.0
    %184 = vmatpush1.xpose.msra.mxu0 0.0
    %185 = vmatprep.subr.mxu0 0.0
    %186 = vmatpush1.xpose.msra.mxu0 0.0
    %187 = vmatprep.subr.mxu0 0.0
    %188 = vmatpush1.xpose.msra.mxu0 %v156
    %189 = vmatprep.subr.mxu0 0.0
    %190 = vmatpush2.xpose.msra.mxu0 0.0
    %191 = vmatprep.subr.mxu0 0.0
    %192 = vmatpush2.xpose.msra.mxu0 0.0
    %193 = vmatprep.subr.mxu0 0.0
    %194 = vmatpush2.xpose.msra.mxu0 0.0
    %195 = vmatprep.subr.mxu0 0.0
    %196 = vmatpush2.xpose.msra.mxu0 0.0
    %197 = vmatprep.subr.mxu0 0.0
    %198 = vmatpush2.xpose.msra.mxu0 0.0
    %199 = vmatprep.subr.mxu0 0.0
    %200 = vmatpush2.xpose.msra.mxu0 0.0
    %201 = vmatprep.subr.mxu0 0.0
    %202 = vmatpush2.xpose.msra.mxu0 0.0
    %203 = vmatprep.subr.mxu0 0.0
    %204 = vmatpush2.xpose.msra.mxu0 0.0
    %205 = vmatprep.subr.mxu0 0.0
    %206 = vmatpush2.xpose.msra.mxu0 0.0
    %207 = vmatprep.subr.mxu0 0.0
    %208 = vmatpush2.xpose.msra.mxu0 0.0
    %209 = vmatprep.subr.mxu0 0.0
    %210 = vmatpush2.xpose.msra.mxu0 0.0
    %211 = vmatprep.subr.mxu0 0.0
    %212 = vmatpush2.xpose.msra.mxu0 0.0
    %213 = vmatprep.subr.mxu0 0.0
    %214 = vmatpush2.xpose.msra.mxu0 0.0
    %215 = vmatprep.subr.mxu0 0.0
    %216 = vmatpush2.xpose.msra.mxu0 0.0
    %217 = vmatprep.subr.mxu0 0.0
    %218 = vmatpush2.xpose.msra.mxu0 0.0
    %219 = vmatprep.subr.mxu0 0.0
    %220 = vmatpush2.xpose.msra.mxu0 0.0
    %221 = vmatprep.mubr.f32.mxu0 0.0
    %222 = vmatmul.mubr.f32.gmra.mxu0 1.0
    %v223 = vpop.f32.mrf.mxu0
    %v224 = vadd.f32 0.0, %v223
    %v225 = vpop.f32.mrf.mxu0
    %226 = vdwg.mxu0
    %vm227 = vcmask 57344
    %228 = vst.msk [vmem:[#allocation8] sm:$0x1] %vm227, %v224
    // Predicated region
    $region30: #{tpu_custom_call.1} parent=1 // pred_check
      _
    $region31: #{tpu_custom_call.1} parent=1 // pred_check_branch
      %230 = sbr.rel (0) target = $region33
    $region32: #{tpu_custom_call.1} parent=1 // pred_region
      %s232 = ssub.s32 16, 16
      %233 = vsyncadd [#allocation4], %s232
      %s235 = sshll.u32 [#allocation8], 4
      %s236 = int_to_ptr.vmem [resolvable:$true] %s235
      %238 = dma.vmem_to_hbm [thread:$0]  %s236, 16, %s4, [#allocation4]
    $region33: #{tpu_custom_call.1} parent=1 // pred_fallthru
      _
    // Predicated region
    $region34: #{tpu_custom_call.1} parent=1 // pred_check
      _
    $region35: #{tpu_custom_call.1} parent=1 // pred_check_branch
      %240 = sbr.rel (0) target = $region37
    $region36: #{tpu_custom_call.1} parent=1 // pred_region
      %241 = dma.done [#allocation4], 16
    $region37: #{tpu_custom_call.1} parent=1 // pred_fallthru
      _
    %242 = vsyncpa [#allocation3], 1
    %243 = vsyncpa [#allocation6], 1
    %244 = vsyncpa [#allocation4], 1

</llo_original>
